<compile_context>
chip_gen: v5e
topology: v5e:2x2
jax: 0.10.0
libtpu: 0.0.40
codegen_flags: <defaults>
</compile_context>

<pallas_src>
import functools

import numpy as np
import jax
import jax.numpy as jnp
from jax.experimental import pallas as pl
from jax.experimental.pallas import tpu as pltpu


# --------------------------------------------------------------------------
# Helpers
# --------------------------------------------------------------------------
def _round_up(x, m):
    return (x + m - 1) // m * m


@functools.lru_cache(maxsize=None)
def _max_tile():
    """256-wide tiles only on v6e/v7x class MXUs (2x256x256); 128 elsewhere
    (v5e/v5p/v4 and older have 128x128 MXUs, so 256 tiles only add padding)."""
    try:
        kind = jax.devices()[0].device_kind.lower()
    except Exception:
        return 128
    if "v6" in kind or "v7" in kind:
        return 256
    return 128


# VMEM working-set budget used to decide that a single full-K step is safe.
# Kept well under the v7x physical 64 MiB (and the default scoped limits).
_VMEM_BUDGET = 24 * 1024 * 1024


def _matmul_vmem_bytes(tm, tk, tn):
    # Double-buffered A/B/residual/out (bf16) + scale/bias (fp32) + fp32 scratch
    # (scratch only exists on the fallback path; counted anyway as headroom).
    return 2 * ((tm * tk + tk * tn + 2 * tm * tn) * 2 + 2 * tn * 4) + tm * tn * 4


def _tiles_for(m, k, n):
    """Pick (tm, tk, tn, mp, kp, np_) for a logical (M,K)x(K,N) matmul."""
    big = _max_tile()
    tm = min(big, _round_up(m, 8))           # no huge zero-row padding for small M
    mp = _round_up(m, tm)
    np_ = _round_up(n, 128)
    tn = big if (np_ % big == 0) else 128
    # Keep >=2 blocks on a parallel grid axis when possible so v7x's two
    # TensorCores both get work (M is tiny here, so split N instead).
    if mp // tm == 1 and np_ // tn == 1 and np_ >= 256:
        tn = 128
    kp = _round_up(k, 128)
    if _matmul_vmem_bytes(tm, kp, tn) <= _VMEM_BUDGET:
        tk = kp                               # single full-K step (normal case)
    else:                                     # fallback: split K across grid steps
        tk = big
        kp = _round_up(k, big)
    return tm, tk, tn, mp, kp, np_


# --------------------------------------------------------------------------
# Pallas kernels
# --------------------------------------------------------------------------
def _matmul_fullk_kernel(a_ref, b_ref, s_ref, c_ref, *rest, relu, has_resid):
    """out = (A @ B) * scale + bias (+ residual) (+ ReLU).  Grid = (M, N); the
    whole K dimension is one MXU pass -> no scratch, no init/finalize gates."""
    if has_resid:
        r_ref, o_ref = rest
    else:
        (o_ref,) = rest
    out = jnp.dot(a_ref[...], b_ref[...], preferred_element_type=jnp.float32)
    out = out * s_ref[...] + c_ref[...]        # fp32 epilogue math
    if has_resid:
        out = out + r_ref[...].astype(jnp.float32)
    if relu:
        out = jnp.maximum(out, 0.0)
    o_ref[...] = out.astype(o_ref.dtype)


def _matmul_acc_kernel(a_ref, b_ref, s_ref, c_ref, *rest, relu, has_resid):
    """Fallback path: K split across grid steps, fp32 VMEM accumulator."""
    if has_resid:
        r_ref, o_ref, acc_ref = rest
    else:
        o_ref, acc_ref = rest
    k = pl.program_id(2)

    @pl.when(k == 0)
    def _():
        acc_ref[...] = jnp.zeros_like(acc_ref)

    acc_ref[...] += jnp.dot(a_ref[...], b_ref[...],
                            preferred_element_type=jnp.float32)

    @pl.when(k == pl.num_programs(2) - 1)
    def _():
        out = acc_ref[...] * s_ref[...] + c_ref[...]
        if has_resid:
            out = out + r_ref[...].astype(jnp.float32)
        if relu:
            out = jnp.maximum(out, 0.0)
        o_ref[...] = out.astype(o_ref.dtype)


# --------------------------------------------------------------------------
# Cached pallas_call builders (one Mosaic kernel per unique configuration)
# --------------------------------------------------------------------------
@functools.lru_cache(maxsize=None)
def _get_matmul_fn(mp, kp, np_, tm, tk, tn, relu, has_resid, out_dtype_name):
    out_dtype = jnp.dtype(out_dtype_name)
    nk = kp // tk
    vmem_limit = int(min(64 << 20,
                         max(32 << 20, _matmul_vmem_bytes(tm, tk, tn) + (4 << 20))))

    if nk == 1:
        # Single full-K step per output tile: 2-D grid, no accumulator scratch.
        in_specs = [
            pl.BlockSpec((tm, tk), lambda i, j: (i, 0)),   # A (bf16)
            pl.BlockSpec((tk, tn), lambda i, j: (0, j)),   # B (bf16, pre-padded)
            pl.BlockSpec((1, tn), lambda i, j: (0, j)),    # scale (fp32)
            pl.BlockSpec((1, tn), lambda i, j: (0, j)),    # bias  (fp32)
        ]
        if has_resid:
            in_specs.append(pl.BlockSpec((tm, tn), lambda i, j: (i, j)))
        kernel = functools.partial(_matmul_fullk_kernel, relu=relu,
                                   has_resid=has_resid)
        return pl.pallas_call(
            kernel,
            out_shape=jax.ShapeDtypeStruct((mp, np_), out_dtype),
            grid_spec=pltpu.PrefetchScalarGridSpec(
                num_scalar_prefetch=0,
                grid=(mp // tm, np_ // tn),
                in_specs=in_specs,
                out_specs=pl.BlockSpec((tm, tn), lambda i, j: (i, j)),
            ),
            compiler_params=pltpu.CompilerParams(
                dimension_semantics=("parallel", "parallel"),
                vmem_limit_bytes=vmem_limit),
        )

    # Fallback: K split across grid steps with an fp32 VMEM accumulator.
    in_specs = [
        pl.BlockSpec((tm, tk), lambda i, j, k: (i, k)),
        pl.BlockSpec((tk, tn), lambda i, j, k: (k, j)),
        pl.BlockSpec((1, tn), lambda i, j, k: (0, j)),
        pl.BlockSpec((1, tn), lambda i, j, k: (0, j)),
    ]
    if has_resid:
        in_specs.append(pl.BlockSpec((tm, tn), lambda i, j, k: (i, j)))
    kernel = functools.partial(_matmul_acc_kernel, relu=relu, has_resid=has_resid)
    return pl.pallas_call(
        kernel,
        out_shape=jax.ShapeDtypeStruct((mp, np_), out_dtype),
        grid_spec=pltpu.PrefetchScalarGridSpec(
            num_scalar_prefetch=0,
            grid=(mp // tm, np_ // tn, nk),
            in_specs=in_specs,
            out_specs=pl.BlockSpec((tm, tn), lambda i, j, k: (i, j)),
            scratch_shapes=[pltpu.VMEM((tm, tn), jnp.float32)],
        ),
        compiler_params=pltpu.CompilerParams(
            dimension_semantics=("parallel", "parallel", "arbitrary"),
            vmem_limit_bytes=vmem_limit),
    )


# --------------------------------------------------------------------------
# Wrappers (glue: padding, im2col, reshapes) — always called under jax.jit
# --------------------------------------------------------------------------
def matmul_scale_bias(a, b_pre, scale, bias, relu, residual=None,
                      out_dtype=jnp.bfloat16):
    """a:(M,K)  b_pre:(Kpad,Npad) pre-padded weight  scale,bias:(N,)
    residual:(M,N) or None  ->  (M,N)."""
    m, k = a.shape
    n = scale.shape[0]
    tm, tk, tn, mp, kp, np_ = _tiles_for(m, k, n)
    a_p = jnp.pad(a.astype(jnp.bfloat16), ((0, mp - m), (0, kp - k)))
    b_p = b_pre
    if b_p.shape != (kp, np_):   # only on the (never-hit) fallback K split
        b_p = jnp.pad(b_p, ((0, kp - b_p.shape[0]), (0, np_ - b_p.shape[1])))
    s_p = jnp.pad(scale.astype(jnp.float32).reshape(1, n), ((0, 0), (0, np_ - n)))
    c_p = jnp.pad(bias.astype(jnp.float32).reshape(1, n), ((0, 0), (0, np_ - n)))
    args = [a_p, b_p, s_p, c_p]
    has_resid = residual is not None
    if has_resid:
        args.append(jnp.pad(residual.astype(jnp.bfloat16),
                            ((0, mp - m), (0, np_ - n))))
    fn = _get_matmul_fn(mp, kp, np_, tm, tk, tn, bool(relu), has_resid,
                        jnp.dtype(out_dtype).name)
    out = fn(*args)
    return out[:m, :n]


def conv_bn(x, p, kh, kw, stride, padding, relu, residual=None):
    """x: (N,H,W,Cin) bf16; p['w']: pre-padded (kh*kw*Cin -> Kpad, Cout -> Npad)
    bf16 matrix; p['s'], p['b']: (Cout,) fp32 folded BatchNorm."""
    n, h, w, cin = x.shape
    cout = p["s"].shape[0]
    if padding > 0:
        x = jnp.pad(x, ((0, 0), (padding, padding), (padding, padding), (0, 0)))
    hp, wp = x.shape[1], x.shape[2]
    ho = (hp - kh) // stride + 1
    wo = (wp - kw) // stride + 1
    if kh == 1 and kw == 1:
        xs = x if stride == 1 else x[:, ::stride, ::stride, :]
        a = xs.reshape(n * ho * wo, cin)
    else:
        # TODO(synk): kxk convs still materialize the tap im2col in HBM (fused
        # under jit, ~3 MB/forward at this size); a direct-conv kernel pulling
        # shifted windows via manual DMA from an ANY-space ref would remove it.
        cols = [x[:, di:di + stride * (ho - 1) + 1:stride,
                  dj:dj + stride * (wo - 1) + 1:stride, :]
                for di in range(kh) for dj in range(kw)]
        a = jnp.concatenate(cols, axis=-1).reshape(n * ho * wo, kh * kw * cin)
    res2 = None if residual is None else residual.reshape(n * ho * wo, cout)
    out = matmul_scale_bias(a, p["w"], p["s"], p["b"], relu, residual=res2)
    return out.reshape(n, ho, wo, cout)


def maxpool_3x3_s2_p1(x):
    """3x3/2 max-pool as a tree of jnp.maximum over the 9 taps (VPU-only under
    jit); avoids stacking a 9x copy of the activation in HBM."""
    n, h, w, c = x.shape
    xp = jnp.pad(x, ((0, 0), (1, 1), (1, 1), (0, 0)),
                 constant_values=-jnp.inf)
    ho = (h + 2 - 3) // 2 + 1
    wo = (w + 2 - 3) // 2 + 1
    out = None
    for di in range(3):
        for dj in range(3):
            tap = xp[:, di:di + 2 * (ho - 1) + 1:2,
                     dj:dj + 2 * (wo - 1) + 1:2, :]
            out = tap if out is None else jnp.maximum(out, tap)
    return out


# --------------------------------------------------------------------------
# Synthetic deterministic parameter init (ResNet-101 topology)
# --------------------------------------------------------------------------
class KeyGen:
    def __init__(self, seed):
        self.key = jax.random.PRNGKey(seed)
        self.i = 0

    def __call__(self):
        self.i += 1
        return jax.random.fold_in(self.key, self.i)


def init_conv_bn(kg, kh, kw, cin, cout):
    std = np.float32(np.sqrt(2.0 / (kh * kw * cin)))
    w = jax.random.normal(kg(), (kh, kw, cin, cout), jnp.float32) * std
    k = kh * kw * cin
    kp = _round_up(k, 128)
    np_ = _round_up(cout, 128)
    # Pre-reshape + pre-pad once at init: no per-forward weight padding.
    w2 = jnp.pad(w.reshape(k, cout),
                 ((0, kp - k), (0, np_ - cout))).astype(jnp.bfloat16)
    # Inference BatchNorm folded into per-channel fp32 scale & bias.
    s = 1.0 + 0.05 * jax.random.normal(kg(), (cout,), jnp.float32)
    b = 0.05 * jax.random.normal(kg(), (cout,), jnp.float32)
    return {"w": w2, "s": s, "b": b}


def init_bottleneck(kg, cin, planes, stride):
    p = {
        "c1": init_conv_bn(kg, 1, 1, cin, planes),
        "c2": init_conv_bn(kg, 3, 3, planes, planes),
        "c3": init_conv_bn(kg, 1, 1, planes, planes * 4),
        "down": None,
    }
    if stride != 1 or cin != planes * 4:
        p["down"] = init_conv_bn(kg, 1, 1, cin, planes * 4)
    return p, stride     # stride kept out of the pytree (static under jit)


def init_resnet101(kg, class_num):
    params = {"conv1": init_conv_bn(kg, 7, 7, 3, 64)}
    layers = []
    cin = 64
    for planes, nblocks, stride in ((64, 3, 1), (128, 4, 2),
                                    (256, 23, 2), (512, 3, 2)):
        blocks = []
        for bi in range(nblocks):
            s = stride if bi == 0 else 1
            blocks.append(init_bottleneck(kg, cin, planes, s))
            cin = planes * 4
        layers.append(blocks)
    params["layers"] = layers
    # Head stays fp32 end-to-end (tiny GEMV done in plain jnp).
    params["fc_w"] = (jax.random.normal(kg(), (2048, class_num), jnp.float32) *
                      np.float32(1.0 / np.sqrt(2048.0)))
    params["fc_b"] = 0.01 * jax.random.normal(kg(), (class_num,), jnp.float32)
    return params


# --------------------------------------------------------------------------
# Forward pass (stem / bottleneck / head each jitted -> glue gets fused,
# ~35 device dispatches per forward)
# --------------------------------------------------------------------------
@functools.partial(jax.jit, static_argnames=("stride",))
def bottleneck_forward(x, p, stride):
    out = conv_bn(x, p["c1"], 1, 1, stride=1, padding=0, relu=True)
    out = conv_bn(out, p["c2"], 3, 3, stride=stride, padding=1, relu=True)
    if p["down"] is not None:
        identity = conv_bn(x, p["down"], 1, 1, stride=stride, padding=0,
                           relu=False)
    else:
        identity = x
    # residual add + ReLU fused into the c3 matmul epilogue
    return conv_bn(out, p["c3"], 1, 1, stride=1, padding=0, relu=True,
                   residual=identity)


@jax.jit
def stem_forward(conv1_p, x_nchw):
    x = jnp.transpose(x_nchw, (0, 2, 3, 1)).astype(jnp.bfloat16)  # NCHW->NHWC
    x = conv_bn(x, conv1_p, 7, 7, stride=2, padding=3, relu=True)
    return maxpool_3x3_s2_p1(x)


@jax.jit
def head_forward(fc_w, fc_b, x):
    # Adaptive avg pool + flatten + fc in fp32; a padded Pallas call would be
    # pure overhead for this 2x2048 @ 2048x10 GEMV.
    feat = jnp.mean(x.astype(jnp.float32), axis=(1, 2))
    return feat @ fc_w + fc_b


def resnet101_forward(params, x_nchw):
    x = stem_forward(params["conv1"], x_nchw)
    for blocks in params["layers"]:
        for bp, stride in blocks:
            x = bottleneck_forward(x, bp, stride)
    return head_forward(params["fc_w"], params["fc_b"], x)


# --------------------------------------------------------------------------
if __name__ == "__main__":
    CLASS_NUM = 10
    kg = KeyGen(0)
    params = init_resnet101(kg, CLASS_NUM)

    key_x = jax.random.PRNGKey(0)
    x = jax.random.normal(key_x, (2, 3, 32, 32), jnp.float32)  # NCHW like PyTorch

    logits = resnet101_forward(params, x)
    logits = jax.block_until_ready(logits)

    assert logits.shape == (2, CLASS_NUM), logits.shape
    assert bool(jnp.all(jnp.isfinite(logits)))
    print("KERNEL_OK")
</pallas_src>

<mosaic_0001>
module attributes {stable_mosaic.version = 11 : i64} {
  func.func @_matmul_fullk_kernel(%arg0: i32, %arg1: i32, %arg2: memref<128x256xbf16, #tpu.memory_space<vmem>>, %arg3: memref<256x128xbf16, #tpu.memory_space<vmem>>, %arg4: memref<1x128xf32, #tpu.memory_space<vmem>>, %arg5: memref<1x128xf32, #tpu.memory_space<vmem>>, %arg6: memref<128x128xbf16, #tpu.memory_space<vmem>>) attributes {dimension_semantics = [#tpu.dimension_semantics<parallel>, #tpu.dimension_semantics<parallel>], iteration_bounds = array<i64: 4, 1>, scalar_prefetch = 0 : i64, scratch_operands = 0 : i64, tpu.core_type = #tpu.core_type<tc>, window_params = [{transform_indices = @transform_0, window_bounds = array<i64: 128, 256>}, {transform_indices = @transform_1, window_bounds = array<i64: 256, 128>}, {transform_indices = @transform_2, window_bounds = array<i64: 1, 128>}, {transform_indices = @transform_3, window_bounds = array<i64: 1, 128>}, {transform_indices = @transform_4, window_bounds = array<i64: 128, 128>}]} {
    %c0 = arith.constant 0 : index
    %c0_0 = arith.constant 0 : index
    %0 = vector.load %arg2[%c0, %c0_0] : memref<128x256xbf16, #tpu.memory_space<vmem>>, vector<128x256xbf16>
    %c0_1 = arith.constant 0 : index
    %c0_2 = arith.constant 0 : index
    %1 = vector.load %arg3[%c0_1, %c0_2] : memref<256x128xbf16, #tpu.memory_space<vmem>>, vector<256x128xbf16>
    %cst = arith.constant dense<0.000000e+00> : vector<128x128xf32>
    %2 = tpu.matmul %0, %1, %cst {dimension_numbers = #tpu.dot_dimension_numbers<[1], [0], [0], [1], [0, 0, 1, 1], [], []>} : vector<128x256xbf16>, vector<256x128xbf16>, vector<128x128xf32> -> vector<128x128xf32>
    %c0_3 = arith.constant 0 : index
    %c0_4 = arith.constant 0 : index
    %3 = vector.load %arg4[%c0_3, %c0_4] : memref<1x128xf32, #tpu.memory_space<vmem>>, vector<1x128xf32>
    %4 = vector.broadcast %3 : vector<1x128xf32> to vector<128x128xf32>
    %5 = arith.mulf %2, %4 : vector<128x128xf32>
    %c0_5 = arith.constant 0 : index
    %c0_6 = arith.constant 0 : index
    %6 = vector.load %arg5[%c0_5, %c0_6] : memref<1x128xf32, #tpu.memory_space<vmem>>, vector<1x128xf32>
    %7 = vector.broadcast %6 : vector<1x128xf32> to vector<128x128xf32>
    %8 = arith.addf %5, %7 : vector<128x128xf32>
    %cst_7 = arith.constant 0.000000e+00 : f32
    %9 = vector.broadcast %cst_7 : f32 to vector<128x128xf32>
    %10 = arith.maximumf %8, %9 : vector<128x128xf32>
    %11 = arith.truncf %10 : vector<128x128xf32> to vector<128x128xbf16>
    %c0_8 = arith.constant 0 : index
    %c0_9 = arith.constant 0 : index
    %12 = vector.load %arg6[%c0_8, %c0_9] : memref<128x128xbf16, #tpu.memory_space<vmem>>, vector<128x128xbf16>
    tpu.vector_store %arg6[%c0_8, %c0_9], %11 {strides = array<i32>} : memref<128x128xbf16, #tpu.memory_space<vmem>>, vector<128x128xbf16>,
    return
  }
  func.func @transform_0(%arg0: i32, %arg1: i32) -> (i32, i32) {
    %c0_i32 = arith.constant 0 : i32
    %c0_i32_0 = arith.constant 0 : i32
    return %arg0, %c0_i32 : i32, i32
  }
  func.func @transform_1(%arg0: i32, %arg1: i32) -> (i32, i32) {
    %c0_i32 = arith.constant 0 : i32
    %c0_i32_0 = arith.constant 0 : i32
    return %c0_i32, %arg1 : i32, i32
  }
  func.func @transform_2(%arg0: i32, %arg1: i32) -> (i32, i32) {
    %c0_i32 = arith.constant 0 : i32
    %c0_i32_0 = arith.constant 0 : i32
    return %c0_i32, %arg1 : i32, i32
  }
  func.func @transform_3(%arg0: i32, %arg1: i32) -> (i32, i32) {
    %c0_i32 = arith.constant 0 : i32
    %c0_i32_0 = arith.constant 0 : i32
    return %c0_i32, %arg1 : i32, i32
  }
  func.func @transform_4(%arg0: i32, %arg1: i32) -> (i32, i32) {
    %c0_i32 = arith.constant 0 : i32
    return %arg0, %arg1 : i32, i32
  }
}

</mosaic_0001>

<llo_original>
// kernel: stem_forward.1
$region0: #{stem_forward.1}
  #allocation0 [shape = 'u32[]', space=smem, size = 0x4, offset = 0x4, fixed_abs, tag = 'smem constant byte address 0x4 - core index']
  #allocation1 [shape = 'u32[72,128]{1,0:T(1,128)}', space=vmem, size = 0x9000, scoped, tag = 'internal scratch']
  %s0 = inlined_call_operand.vmem [shape: bf16[512,256], index: 0, kind: input, shape index: {}]
  %s1 = inlined_call_operand.vmem [shape: bf16[256,128], index: 1, kind: input, shape index: {}]
  %s2 = inlined_call_operand.vmem [shape: f32[1,128], index: 2, kind: input, shape index: {}]
  %s3 = inlined_call_operand.vmem [shape: f32[1,128], index: 3, kind: input, shape index: {}]
  %s4 = inlined_call_operand.vmem [shape: bf16[512,128], index: 4, kind: output, shape index: {}]
  %s5 = sld [smem:[#allocation0]]
  $region49: #{stem_forward.1} parent=0
    _
  %s7 = ssub.s32 1, %s5
  %s8 = scalar_select 0, %s7, %s5
  loop: start=0, step=1, limit=6
  $region2: #{stem_forward.1} parent=0 // loop_pre_header
    _
  $region3: #{stem_forward.1} parent=0 // loop_header
    %s10 = sphi 0, %s14
    %p11 = scmp.ge.s32.totalorder %s10, 6
    %s17 = sphi 0, %s29
    %s18 = sphi 0, %s25
    %s19 = sphi 0, %s17
    %s20 = sphi 0, %s18
    %s21 = sphi 0, %s19
    %s22 = sphi 0, %s20
    %s32 = sphi 0, %s34
    %s35 = sphi 0, %s32
    %s36 = sphi 0, %s35
    %s52 = sphi 0, %s36
    %s58 = sphi 0, %s60
    %s61 = sphi 0, %s58
    %s62 = sphi 0, %s61
    %s78 = sphi 0, %s62
    %s84 = sphi 0, %s86
    %s87 = sphi 0, %s84
    %s88 = sphi 0, %s87
    %s104 = sphi 0, %s88
    %s110 = sphi 0, %s112
    %s113 = sphi 0, %s110
    %s114 = sphi 0, %s113
    %s130 = sphi 0, %s114
    %s138 = sphi 0, %s140
    %s141 = sphi 0, %s138
    %s142 = sphi 0, %s141
    %s158 = sphi 0, %s142
  $region4: #{stem_forward.1} parent=0 // loop_header_branch
    %13 = sbr.rel (%p11) target = $region8
  $region5: #{stem_forward.1} parent=0 // loop_body
    %s15 = ssub.s32 %s10, 1
    %s16 = ssub.s32 %s10, 2
    %s23 = sadd.s32 1, %s18
    %p24 = scmp.ge.s32.totalorder %s23, 1
    %s25 = scalar_select %p24, 0, %s23
    %s26 = sadd.s32 1, %s17
    %s27 = scalar_select %p24, %s26, %s17
    %p28 = scmp.ge.s32.totalorder %s27, 4
    %s29 = scalar_select %p28, 0, %s27
    %s30 = ssub.s32 %s17, %s29
    %p31 = scmp.eq.s32.totalorder %s30, 0
    %s33 = sadd.s32 %s32, 1
    %s34 = scalar_select %p31, %s32, %s33
    %p37 = pneg %p31
    %p38 = scmp.eq.s32.totalorder %s10, 3
    %p39 = por %p37, %p38
    %p40 = scmp.ne.s32.totalorder %s32, %s35
    %p41 = scmp.eq.s32.totalorder %s10, 0
    %p42 = por %p40, %p41
    %p43 = scmp.ne.s32.totalorder %s32, %s35
    %p44 = scmp.eq.s32.totalorder %s15, 3
    %p45 = por %p43, %p44
    %p46 = scmp.ne.s32.totalorder %s35, %s36
    %p47 = scmp.eq.s32.totalorder %s15, 0
    %p48 = por %p46, %p47
    %p49 = scmp.ne.s32.totalorder %s35, %s36
    %p50 = scmp.eq.s32.totalorder %s16, 3
    %p51 = por %p49, %p50
    %p53 = scmp.ne.s32.totalorder %s36, %s52
    %p54 = scmp.eq.s32.totalorder %s16, 0
    %p55 = por %p53, %p54
    %s56 = ssub.s32 %s18, %s25
    %p57 = scmp.eq.s32.totalorder %s56, 0
    %s59 = sadd.s32 %s58, 1
    %s60 = scalar_select %p57, %s58, %s59
    %p63 = pneg %p57
    %p64 = scmp.eq.s32.totalorder %s10, 3
    %p65 = por %p63, %p64
    %p66 = scmp.ne.s32.totalorder %s58, %s61
    %p67 = scmp.eq.s32.totalorder %s10, 0
    %p68 = por %p66, %p67
    %p69 = scmp.ne.s32.totalorder %s58, %s61
    %p70 = scmp.eq.s32.totalorder %s15, 3
    %p71 = por %p69, %p70
    %p72 = scmp.ne.s32.totalorder %s61, %s62
    %p73 = scmp.eq.s32.totalorder %s15, 0
    %p74 = por %p72, %p73
    %p75 = scmp.ne.s32.totalorder %s61, %s62
    %p76 = scmp.eq.s32.totalorder %s16, 3
    %p77 = por %p75, %p76
    %p79 = scmp.ne.s32.totalorder %s62, %s78
    %p80 = scmp.eq.s32.totalorder %s16, 0
    %p81 = por %p79, %p80
    %s82 = ssub.s32 %s18, %s25
    %p83 = scmp.eq.s32.totalorder %s82, 0
    %s85 = sadd.s32 %s84, 1
    %s86 = scalar_select %p83, %s84, %s85
    %p89 = pneg %p83
    %p90 = scmp.eq.s32.totalorder %s10, 3
    %p91 = por %p89, %p90
    %p92 = scmp.ne.s32.totalorder %s84, %s87
    %p93 = scmp.eq.s32.totalorder %s10, 0
    %p94 = por %p92, %p93
    %p95 = scmp.ne.s32.totalorder %s84, %s87
    %p96 = scmp.eq.s32.totalorder %s15, 3
    %p97 = por %p95, %p96
    %p98 = scmp.ne.s32.totalorder %s87, %s88
    %p99 = scmp.eq.s32.totalorder %s15, 0
    %p100 = por %p98, %p99
    %p101 = scmp.ne.s32.totalorder %s87, %s88
    %p102 = scmp.eq.s32.totalorder %s16, 3
    %p103 = por %p101, %p102
    %p105 = scmp.ne.s32.totalorder %s88, %s104
    %p106 = scmp.eq.s32.totalorder %s16, 0
    %p107 = por %p105, %p106
    %s108 = ssub.s32 %s18, %s25
    %p109 = scmp.eq.s32.totalorder %s108, 0
    %s111 = sadd.s32 %s110, 1
    %s112 = scalar_select %p109, %s110, %s111
    %p115 = pneg %p109
    %p116 = scmp.eq.s32.totalorder %s10, 3
    %p117 = por %p115, %p116
    %p118 = scmp.ne.s32.totalorder %s110, %s113
    %p119 = scmp.eq.s32.totalorder %s10, 0
    %p120 = por %p118, %p119
    %p121 = scmp.ne.s32.totalorder %s110, %s113
    %p122 = scmp.eq.s32.totalorder %s15, 3
    %p123 = por %p121, %p122
    %p124 = scmp.ne.s32.totalorder %s113, %s114
    %p125 = scmp.eq.s32.totalorder %s15, 0
    %p126 = por %p124, %p125
    %p127 = scmp.ne.s32.totalorder %s113, %s114
    %p128 = scmp.eq.s32.totalorder %s16, 3
    %p129 = por %p127, %p128
    %p131 = scmp.ne.s32.totalorder %s114, %s130
    %p132 = scmp.eq.s32.totalorder %s16, 0
    %p133 = por %p131, %p132
    %s134 = ssub.s32 %s17, %s29
    %s135 = ssub.s32 %s18, %s25
    %s136 = sor.u32 %s134, %s135
    %p137 = scmp.eq.s32.totalorder %s136, 0
    %s139 = sadd.s32 %s138, 1
    %s140 = scalar_select %p137, %s138, %s139
    %p143 = pneg %p137
    %p144 = scmp.eq.s32.totalorder %s10, 3
    %p145 = por %p143, %p144
    %p146 = scmp.ne.s32.totalorder %s138, %s141
    %p147 = scmp.eq.s32.totalorder %s10, 0
    %p148 = por %p146, %p147
    %p149 = scmp.ne.s32.totalorder %s138, %s141
    %p150 = scmp.eq.s32.totalorder %s15, 3
    %p151 = por %p149, %p150
    %p152 = scmp.ne.s32.totalorder %s141, %s142
    %p153 = scmp.eq.s32.totalorder %s15, 0
    %p154 = por %p152, %p153
    %p155 = scmp.ne.s32.totalorder %s141, %s142
    %p156 = scmp.eq.s32.totalorder %s16, 3
    %p157 = por %p155, %p156
    %p159 = scmp.ne.s32.totalorder %s142, %s158
    %p160 = scmp.eq.s32.totalorder %s16, 0
    %p161 = por %p159, %p160
    %p162 = scmp.le.s32.totalorder 1, %s10
    %p163 = scmp.lt.s32.totalorder %s10, 5
    %p164 = pnand %p162, %p163
    %p165 = pneg %p164
    // Predicated region
    $region9: #{stem_forward.1} parent=5 // pred_check
      _
    $region10: #{stem_forward.1} parent=5 // pred_check_branch
      %167 = sbr.rel (%p164) target = $region12
    $region11: #{stem_forward.1} parent=5 // pred_region
      %s168 = ssub.s32 %s10, 1
      // Predicated region
      $region13: #{stem_forward.1} parent=11 // pred_check
        %p169 = pneg %p74
      $region14: #{stem_forward.1} parent=11 // pred_check_branch
        %171 = sbr.rel (%p169) target = $region16
      $region15: #{stem_forward.1} parent=11 // pred_region
        %p172 = scmp.lt.s32.totalorder %s20, 0
        %s173 = scalar_select %p172, %s20, 0
        %s174 = smul.addr %s173, 4
        %s175 = scalar_lea.vmem %s1, %s174
      $region16: #{stem_forward.1} parent=11 // pred_fallthru
        _
      // Predicated region
      $region17: #{stem_forward.1} parent=11 // pred_check
        %p176 = pneg %p100
      $region18: #{stem_forward.1} parent=11 // pred_check_branch
        %178 = sbr.rel (%p176) target = $region20
      $region19: #{stem_forward.1} parent=11 // pred_region
        %p179 = scmp.lt.s32.totalorder %s20, 0
        %s180 = scalar_select %p179, %s20, 0
        %s181 = scalar_lea.vmem %s2, %s180
      $region20: #{stem_forward.1} parent=11 // pred_fallthru
        _
      // Predicated region
      $region21: #{stem_forward.1} parent=11 // pred_check
        %p182 = pneg %p126
      $region22: #{stem_forward.1} parent=11 // pred_check_branch
        %184 = sbr.rel (%p182) target = $region24
      $region23: #{stem_forward.1} parent=11 // pred_region
        %p185 = scmp.lt.s32.totalorder %s20, 0
        %s186 = scalar_select %p185, %s20, 0
        %s187 = scalar_lea.vmem %s3, %s186
      $region24: #{stem_forward.1} parent=11 // pred_fallthru
        _
    $region12: #{stem_forward.1} parent=5 // pred_fallthru
      _
    %p188 = scmp.lt.s32.totalorder %s10, 4
    // Predicated region
    $region25: #{stem_forward.1} parent=5 // pred_check
      %p189 = pneg %p188
    $region26: #{stem_forward.1} parent=5 // pred_check_branch
      %191 = sbr.rel (%p189) target = $region28
    $region27: #{stem_forward.1} parent=5 // pred_region
      // Predicated region
      $region29: #{stem_forward.1} parent=27 // pred_check
        %p192 = pneg %p42
      $region30: #{stem_forward.1} parent=27 // pred_check_branch
        %194 = sbr.rel (%p192) target = $region32
      $region31: #{stem_forward.1} parent=27 // pred_region
        %s195 = smul.u32 16, %s17
        %p196 = scmp.lt.s32.totalorder %s195, 63
        %s197 = scalar_select %p196, %s195, 63
        %s198 = smul.addr %s197, 2
        %s199 = smul.addr %s198, 4
        %s200 = scalar_lea.vmem %s0, %s199
        %s201 = smul.u32 16, %s17
      $region32: #{stem_forward.1} parent=27 // pred_fallthru
        _
    $region28: #{stem_forward.1} parent=5 // pred_fallthru
      _
    %p202 = scmp.le.s32.totalorder 1, %s10
    %p203 = scmp.lt.s32.totalorder %s10, 5
    %p204 = pnand %p202, %p203
    %p205 = pneg %p204
    // Predicated region
    $region33: #{stem_forward.1} parent=5 // pred_check
      _
    $region34: #{stem_forward.1} parent=5 // pred_check_branch
      %207 = sbr.rel (%p204) target = $region36
    $region35: #{stem_forward.1} parent=5 // pred_region
      %s208 = ssub.s32 %s10, 1
      %s209 = smul.u32 16, %s19
      %p210 = scmp.lt.s32.totalorder %s209, 63
      %s211 = scalar_select %p210, %s209, 63
      %s212 = smul.addr %s211, 2
      %s213 = smul.addr %s212, 4
      %s214 = scalar_lea.vmem %s0, %s213
      %p215 = pneg %p48
      %p216 = pneg %p45
      %p217 = scmp.lt.s32.totalorder %s20, 0
      %s218 = scalar_select %p217, %s20, 0
      %s219 = smul.addr %s218, 4
      %s220 = scalar_lea.vmem %s1, %s219
      %p221 = pneg %p74
      %p222 = pneg %p71
      %p223 = scmp.lt.s32.totalorder %s20, 0
      %s224 = scalar_select %p223, %s20, 0
      %s225 = scalar_lea.vmem %s2, %s224
      %p226 = pneg %p100
      %p227 = pneg %p97
      %p228 = scmp.lt.s32.totalorder %s20, 0
      %s229 = scalar_select %p228, %s20, 0
      %s230 = scalar_lea.vmem %s3, %s229
      %p231 = pneg %p126
      %p232 = pneg %p123
      %p233 = pneg %p154
      %p234 = pneg %p151
      %s235 = smul.u32 16, %s19
      %p236 = scmp.lt.s32.totalorder %s235, 63
      %s237 = scalar_select %p236, %s235, 63
      %p238 = scmp.lt.s32.totalorder %s20, 0
      %s239 = scalar_select %p238, %s20, 0
      %s240 = sadd.s32 %s239, %s237
      %s241 = smul.addr %s240, 4
      %s242 = scalar_lea.vmem %s4, %s241
      %s243 = smul.u32 16, %s19
      %p244 = scmp.lt.s32.totalorder %s243, 63
      %s245 = scalar_select %p244, %s243, 63
      %s246 = smul.addr %s245, 2
      %s247 = smul.addr %s246, 4
      %s248 = scalar_lea.vmem %s0, %s247
      %s249 = smul.u32 16, %s19
      %p250 = scmp.lt.s32.totalorder %s20, 0
      %s251 = scalar_select %p250, %s20, 0
      %s252 = smul.addr %s251, 4
      %s253 = scalar_lea.vmem %s1, %s252
      %p254 = scmp.lt.s32.totalorder %s20, 0
      %s255 = scalar_select %p254, %s20, 0
      %s256 = scalar_lea.vmem %s2, %s255
      %p257 = scmp.lt.s32.totalorder %s20, 0
      %s258 = scalar_select %p257, %s20, 0
      %s259 = scalar_lea.vmem %s3, %s258
      %s260 = smul.u32 16, %s19
      %p261 = scmp.lt.s32.totalorder %s260, 63
      %s262 = scalar_select %p261, %s260, 63
      %p263 = scmp.lt.s32.totalorder %s20, 0
      %s264 = scalar_select %p263, %s20, 0
      %s265 = sadd.s32 %s264, %s262
      %s266 = smul.addr %s265, 4
      %s267 = scalar_lea.vmem %s4, %s266
      %s268 = smul.u32 16, %s19
      %v269 = vld [vmem:[%s248] sm:$0xff]
      %v270 = vld [vmem:[%s248 + $0x8] sm:$0xff]
      %v271 = vld [vmem:[%s248 + $0x10] sm:$0xff]
      %v272 = vld [vmem:[%s248 + $0x18] sm:$0xff]
      %v273 = vld [vmem:[%s248 + $0x20] sm:$0xff]
      %v274 = vld [vmem:[%s248 + $0x28] sm:$0xff]
      %v275 = vld [vmem:[%s248 + $0x30] sm:$0xff]
      %v276 = vld [vmem:[%s248 + $0x38] sm:$0xff]
      %v277 = vld [vmem:[%s248 + $0x40] sm:$0xff]
      %v278 = vld [vmem:[%s248 + $0x48] sm:$0xff]
      %v279 = vld [vmem:[%s248 + $0x50] sm:$0xff]
      %v280 = vld [vmem:[%s248 + $0x58] sm:$0xff]
      %v281 = vld [vmem:[%s248 + $0x60] sm:$0xff]
      %v282 = vld [vmem:[%s248 + $0x68] sm:$0xff]
      %v283 = vld [vmem:[%s248 + $0x70] sm:$0xff]
      %v284 = vld [vmem:[%s248 + $0x78] sm:$0xff]
      %v285 = vld [vmem:[%s253] sm:$0xf]
      %v286 = vld [vmem:[%s253 + $0x4] sm:$0xf]
      %v287 = vld [vmem:[%s253 + $0x8] sm:$0xf]
      %v288 = vld [vmem:[%s253 + $0xc] sm:$0xf]
      %v289 = vld [vmem:[%s253 + $0x10] sm:$0xf]
      %v290 = vld [vmem:[%s253 + $0x14] sm:$0xf]
      %v291 = vld [vmem:[%s253 + $0x18] sm:$0xf]
      %v292 = vld [vmem:[%s253 + $0x1c] sm:$0xf]
      %v293 = vld [vmem:[%s253 + $0x20] sm:$0xf]
      %v294 = vld [vmem:[%s253 + $0x24] sm:$0xf]
      %v295 = vld [vmem:[%s253 + $0x28] sm:$0xf]
      %v296 = vld [vmem:[%s253 + $0x2c] sm:$0xf]
      %v297 = vld [vmem:[%s253 + $0x30] sm:$0xf]
      %v298 = vld [vmem:[%s253 + $0x34] sm:$0xf]
      %v299 = vld [vmem:[%s253 + $0x38] sm:$0xf]
      %v300 = vld [vmem:[%s253 + $0x3c] sm:$0xf]
      %v301 = vld [vmem:[%s253 + $0x40] sm:$0xf]
      %v302 = vld [vmem:[%s253 + $0x44] sm:$0xf]
      %v303 = vld [vmem:[%s253 + $0x48] sm:$0xf]
      %v304 = vld [vmem:[%s253 + $0x4c] sm:$0xf]
      %v305 = vld [vmem:[%s253 + $0x50] sm:$0xf]
      %v306 = vld [vmem:[%s253 + $0x54] sm:$0xf]
      %v307 = vld [vmem:[%s253 + $0x58] sm:$0xf]
      %v308 = vld [vmem:[%s253 + $0x5c] sm:$0xf]
      %v309 = vld [vmem:[%s253 + $0x60] sm:$0xf]
      %v310 = vld [vmem:[%s253 + $0x64] sm:$0xf]
      %v311 = vld [vmem:[%s253 + $0x68] sm:$0xf]
      %v312 = vld [vmem:[%s253 + $0x6c] sm:$0xf]
      %v313 = vld [vmem:[%s253 + $0x70] sm:$0xf]
      %v314 = vld [vmem:[%s253 + $0x74] sm:$0xf]
      %v315 = vld [vmem:[%s253 + $0x78] sm:$0xf]
      %v316 = vld [vmem:[%s253 + $0x7c] sm:$0xf]
      %v333 = vunpack.c.l.b16 %v269
      %v334 = vunpack.c.h.b16 %v269
      %v335 = vunpack.c.l.b16 %v270
      %v336 = vunpack.c.h.b16 %v270
      %v337 = vunpack.c.l.b16 %v271
      %v338 = vunpack.c.h.b16 %v271
      %v339 = vunpack.c.l.b16 %v272
      %v340 = vunpack.c.h.b16 %v272
      %v341 = vunpack.c.l.b16 %v273
      %v342 = vunpack.c.h.b16 %v273
      %v343 = vunpack.c.l.b16 %v274
      %v344 = vunpack.c.h.b16 %v274
      %v345 = vunpack.c.l.b16 %v275
      %v346 = vunpack.c.h.b16 %v275
      %v347 = vunpack.c.l.b16 %v276
      %v348 = vunpack.c.h.b16 %v276
      %v349 = vunpack.c.l.b16 %v277
      %v350 = vunpack.c.h.b16 %v277
      %v351 = vunpack.c.l.b16 %v278
      %v352 = vunpack.c.h.b16 %v278
      %v353 = vunpack.c.l.b16 %v279
      %v354 = vunpack.c.h.b16 %v279
      %v355 = vunpack.c.l.b16 %v280
      %v356 = vunpack.c.h.b16 %v280
      %v357 = vunpack.c.l.b16 %v281
      %v358 = vunpack.c.h.b16 %v281
      %v359 = vunpack.c.l.b16 %v282
      %v360 = vunpack.c.h.b16 %v282
      %v361 = vunpack.c.l.b16 %v283
      %v362 = vunpack.c.h.b16 %v283
      %v363 = vunpack.c.l.b16 %v284
      %v364 = vunpack.c.h.b16 %v284
      %v365 = vpack.c.b16 %v335, %v333
      %v366 = vpack.c.b16 %v336, %v334
      %v367 = vpack.c.b16 %v339, %v337
      %v368 = vpack.c.b16 %v340, %v338
      %v369 = vpack.c.b16 %v343, %v341
      %v370 = vpack.c.b16 %v344, %v342
      %v371 = vpack.c.b16 %v347, %v345
      %v372 = vpack.c.b16 %v348, %v346
      %v373 = vpack.c.b16 %v351, %v349
      %v374 = vpack.c.b16 %v352, %v350
      %v375 = vpack.c.b16 %v355, %v353
      %v376 = vpack.c.b16 %v356, %v354
      %v377 = vpack.c.b16 %v359, %v357
      %v378 = vpack.c.b16 %v360, %v358
      %v379 = vpack.c.b16 %v363, %v361
      %v380 = vpack.c.b16 %v364, %v362
      %v429 = vunpack.c.l.b16 %v285
      %v430 = vunpack.c.l.b16 %v286
      %v431 = vunpack.c.l.b16 %v287
      %v432 = vunpack.c.l.b16 %v288
      %v433 = vunpack.c.l.b16 %v289
      %v434 = vunpack.c.l.b16 %v290
      %v435 = vunpack.c.l.b16 %v291
      %v436 = vunpack.c.l.b16 %v292
      %v437 = vunpack.c.l.b16 %v293
      %v438 = vunpack.c.l.b16 %v294
      %v439 = vunpack.c.l.b16 %v295
      %v440 = vunpack.c.l.b16 %v296
      %v441 = vunpack.c.l.b16 %v297
      %v442 = vunpack.c.l.b16 %v298
      %v443 = vunpack.c.l.b16 %v299
      %v444 = vunpack.c.l.b16 %v300
      %v445 = vunpack.c.l.b16 %v301
      %v446 = vunpack.c.l.b16 %v302
      %v447 = vunpack.c.l.b16 %v303
      %v448 = vunpack.c.l.b16 %v304
      %v449 = vunpack.c.l.b16 %v305
      %v450 = vunpack.c.l.b16 %v306
      %v451 = vunpack.c.l.b16 %v307
      %v452 = vunpack.c.l.b16 %v308
      %v453 = vunpack.c.l.b16 %v309
      %v454 = vunpack.c.l.b16 %v310
      %v455 = vunpack.c.l.b16 %v311
      %v456 = vunpack.c.l.b16 %v312
      %v457 = vunpack.c.l.b16 %v313
      %v458 = vunpack.c.l.b16 %v314
      %v459 = vunpack.c.l.b16 %v315
      %v460 = vunpack.c.l.b16 %v316
      %v461 = vpack.c.b16 %v430, %v429
      %v462 = vpack.c.b16 %v432, %v431
      %v463 = vpack.c.b16 %v434, %v433
      %v464 = vpack.c.b16 %v436, %v435
      %v465 = vpack.c.b16 %v438, %v437
      %v466 = vpack.c.b16 %v440, %v439
      %v467 = vpack.c.b16 %v442, %v441
      %v468 = vpack.c.b16 %v444, %v443
      %v469 = vpack.c.b16 %v446, %v445
      %v470 = vpack.c.b16 %v448, %v447
      %v471 = vpack.c.b16 %v450, %v449
      %v472 = vpack.c.b16 %v452, %v451
      %v473 = vpack.c.b16 %v454, %v453
      %v474 = vpack.c.b16 %v456, %v455
      %v475 = vpack.c.b16 %v458, %v457
      %v476 = vpack.c.b16 %v460, %v459
      %493 = vmatpush.bf16.msra.mxu0 %v468
      %494 = vmatpush.bf16.msra.mxu0 %v467
      %495 = vmatpush.bf16.msra.mxu0 %v466
      %496 = vmatpush.bf16.msra.mxu0 %v465
      %497 = vmatpush.bf16.msra.mxu0 %v464
      %498 = vmatpush.bf16.msra.mxu0 %v463
      %499 = vmatpush.bf16.msra.mxu0 %v462
      %500 = vmatpush.bf16.msra.mxu0 %v461
      %501 = vmatmul.bf16.gmra.mxu0 %v365
      %v502 = vpop.f32.mrf.mxu0
      %v503 = vadd.f32 0.0, %v502
      %v504 = vpop.f32.mrf.mxu0
      %v505 = vadd.f32 0.0, %v504
      %506 = vmatmul.bf16.gmra.mxu0 %v367
      %v507 = vpop.f32.mrf.mxu0
      %v508 = vadd.f32 0.0, %v507
      %v509 = vpop.f32.mrf.mxu0
      %v510 = vadd.f32 0.0, %v509
      %511 = vmatmul.bf16.gmra.mxu0 %v369
      %v512 = vpop.f32.mrf.mxu0
      %v513 = vadd.f32 0.0, %v512
      %v514 = vpop.f32.mrf.mxu0
      %v515 = vadd.f32 0.0, %v514
      %516 = vmatmul.bf16.gmra.mxu0 %v371
      %v517 = vpop.f32.mrf.mxu0
      %v518 = vadd.f32 0.0, %v517
      %v519 = vpop.f32.mrf.mxu0
      %v520 = vadd.f32 0.0, %v519
      %521 = vmatmul.bf16.gmra.mxu0 %v373
      %v522 = vpop.f32.mrf.mxu0
      %v523 = vadd.f32 0.0, %v522
      %v524 = vpop.f32.mrf.mxu0
      %v525 = vadd.f32 0.0, %v524
      %526 = vmatmul.bf16.gmra.mxu0 %v375
      %v527 = vpop.f32.mrf.mxu0
      %v528 = vadd.f32 0.0, %v527
      %v529 = vpop.f32.mrf.mxu0
      %v530 = vadd.f32 0.0, %v529
      %531 = vmatmul.bf16.gmra.mxu0 %v377
      %v532 = vpop.f32.mrf.mxu0
      %v533 = vadd.f32 0.0, %v532
      %v534 = vpop.f32.mrf.mxu0
      %v535 = vadd.f32 0.0, %v534
      %536 = vmatmul.bf16.gmra.mxu0 %v379
      %v537 = vpop.f32.mrf.mxu0
      %v538 = vadd.f32 0.0, %v537
      %v539 = vpop.f32.mrf.mxu0
      %v540 = vadd.f32 0.0, %v539
      %541 = vdwg.mxu0
      %542 = vmatpush.bf16.msra.mxu0 %v476
      %543 = vmatpush.bf16.msra.mxu0 %v475
      %544 = vmatpush.bf16.msra.mxu0 %v474
      %545 = vmatpush.bf16.msra.mxu0 %v473
      %546 = vmatpush.bf16.msra.mxu0 %v472
      %547 = vmatpush.bf16.msra.mxu0 %v471
      %548 = vmatpush.bf16.msra.mxu0 %v470
      %549 = vmatpush.bf16.msra.mxu0 %v469
      %550 = vmatmul.bf16.gmra.mxu0 %v366
      %v551 = vpop.f32.mrf.mxu0
      %v552 = vadd.f32 %v503, %v551
      %v553 = vpop.f32.mrf.mxu0
      %v554 = vadd.f32 %v505, %v553
      %555 = vmatmul.bf16.gmra.mxu0 %v368
      %v556 = vpop.f32.mrf.mxu0
      %v557 = vadd.f32 %v508, %v556
      %v558 = vpop.f32.mrf.mxu0
      %v559 = vadd.f32 %v510, %v558
      %560 = vmatmul.bf16.gmra.mxu0 %v370
      %v561 = vpop.f32.mrf.mxu0
      %v562 = vadd.f32 %v513, %v561
      %v563 = vpop.f32.mrf.mxu0
      %v564 = vadd.f32 %v515, %v563
      %565 = vmatmul.bf16.gmra.mxu0 %v372
      %v566 = vpop.f32.mrf.mxu0
      %v567 = vadd.f32 %v518, %v566
      %v568 = vpop.f32.mrf.mxu0
      %v569 = vadd.f32 %v520, %v568
      %570 = vmatmul.bf16.gmra.mxu0 %v374
      %v571 = vpop.f32.mrf.mxu0
      %v572 = vadd.f32 %v523, %v571
      %v573 = vpop.f32.mrf.mxu0
      %v574 = vadd.f32 %v525, %v573
      %575 = vmatmul.bf16.gmra.mxu0 %v376
      %v576 = vpop.f32.mrf.mxu0
      %v577 = vadd.f32 %v528, %v576
      %v578 = vpop.f32.mrf.mxu0
      %v579 = vadd.f32 %v530, %v578
      %580 = vmatmul.bf16.gmra.mxu0 %v378
      %v581 = vpop.f32.mrf.mxu0
      %v582 = vadd.f32 %v533, %v581
      %v583 = vpop.f32.mrf.mxu0
      %v584 = vadd.f32 %v535, %v583
      %585 = vmatmul.bf16.gmra.mxu0 %v380
      %v586 = vpop.f32.mrf.mxu0
      %v587 = vadd.f32 %v538, %v586
      %v588 = vpop.f32.mrf.mxu0
      %v589 = vadd.f32 %v540, %v588
      %590 = vdwg.mxu0
      %v591 = vld [vmem:[%s256] sm:$0x1]
      %v593 = vperm.slane %v591, 0
      %v595 = vmul.f32 %v552, %v593
      %v596 = vmul.f32 %v554, %v593
      %v597 = vmul.f32 %v557, %v593
      %v598 = vmul.f32 %v559, %v593
      %v599 = vmul.f32 %v562, %v593
      %v600 = vmul.f32 %v564, %v593
      %v601 = vmul.f32 %v567, %v593
      %v602 = vmul.f32 %v569, %v593
      %v603 = vmul.f32 %v572, %v593
      %v604 = vmul.f32 %v574, %v593
      %v605 = vmul.f32 %v577, %v593
      %v606 = vmul.f32 %v579, %v593
      %v607 = vmul.f32 %v582, %v593
      %v608 = vmul.f32 %v584, %v593
      %v609 = vmul.f32 %v587, %v593
      %v610 = vmul.f32 %v589, %v593
      %v611 = vld [vmem:[%s259] sm:$0x1]
      %v613 = vperm.slane %v611, 0
      %v615 = vadd.f32 %v595, %v613
      %v616 = vadd.f32 %v596, %v613
      %v617 = vadd.f32 %v597, %v613
      %v618 = vadd.f32 %v598, %v613
      %v619 = vadd.f32 %v599, %v613
      %v620 = vadd.f32 %v600, %v613
      %v621 = vadd.f32 %v601, %v613
      %v622 = vadd.f32 %v602, %v613
      %v623 = vadd.f32 %v603, %v613
      %v624 = vadd.f32 %v604, %v613
      %v625 = vadd.f32 %v605, %v613
      %v626 = vadd.f32 %v606, %v613
      %v627 = vadd.f32 %v607, %v613
      %v628 = vadd.f32 %v608, %v613
      %v629 = vadd.f32 %v609, %v613
      %v630 = vadd.f32 %v610, %v613
      %v631 = vmax.f32 %v615, 0.0
      %v632 = vmax.f32 %v616, 0.0
      %v633 = vmax.f32 %v617, 0.0
      %v634 = vmax.f32 %v618, 0.0
      %v635 = vmax.f32 %v619, 0.0
      %v636 = vmax.f32 %v620, 0.0
      %v637 = vmax.f32 %v621, 0.0
      %v638 = vmax.f32 %v622, 0.0
      %v639 = vmax.f32 %v623, 0.0
      %v640 = vmax.f32 %v624, 0.0
      %v641 = vmax.f32 %v625, 0.0
      %v642 = vmax.f32 %v626, 0.0
      %v643 = vmax.f32 %v627, 0.0
      %v644 = vmax.f32 %v628, 0.0
      %v645 = vmax.f32 %v629, 0.0
      %v646 = vmax.f32 %v630, 0.0
      %v647 = vpack.c.bf16 %v631, %v631
      %v648 = vpack.c.bf16 %v632, %v632
      %v649 = vpack.c.bf16 %v633, %v633
      %v650 = vpack.c.bf16 %v634, %v634
      %v651 = vpack.c.bf16 %v635, %v635
      %v652 = vpack.c.bf16 %v636, %v636
      %v653 = vpack.c.bf16 %v637, %v637
      %v654 = vpack.c.bf16 %v638, %v638
      %v655 = vpack.c.bf16 %v639, %v639
      %v656 = vpack.c.bf16 %v640, %v640
      %v657 = vpack.c.bf16 %v641, %v641
      %v658 = vpack.c.bf16 %v642, %v642
      %v659 = vpack.c.bf16 %v643, %v643
      %v660 = vpack.c.bf16 %v644, %v644
      %v661 = vpack.c.bf16 %v645, %v645
      %v662 = vpack.c.bf16 %v646, %v646
      %663 = vst [vmem:[%s267] sm:$0xf] %v647
      %664 = vst [vmem:[%s267 + $0x4] sm:$0xf] %v648
      %665 = vst [vmem:[%s267 + $0x8] sm:$0xf] %v649
      %666 = vst [vmem:[%s267 + $0xc] sm:$0xf] %v650
      %667 = vst [vmem:[%s267 + $0x10] sm:$0xf] %v651
      %668 = vst [vmem:[%s267 + $0x14] sm:$0xf] %v652
      %669 = vst [vmem:[%s267 + $0x18] sm:$0xf] %v653
      %670 = vst [vmem:[%s267 + $0x1c] sm:$0xf] %v654
      %671 = vst [vmem:[%s267 + $0x20] sm:$0xf] %v655
      %672 = vst [vmem:[%s267 + $0x24] sm:$0xf] %v656
      %673 = vst [vmem:[%s267 + $0x28] sm:$0xf] %v657
      %674 = vst [vmem:[%s267 + $0x2c] sm:$0xf] %v658
      %675 = vst [vmem:[%s267 + $0x30] sm:$0xf] %v659
      %676 = vst [vmem:[%s267 + $0x34] sm:$0xf] %v660
      %677 = vst [vmem:[%s267 + $0x38] sm:$0xf] %v661
      %678 = vst [vmem:[%s267 + $0x3c] sm:$0xf] %v662
      %s679 = smul.u32 16, %s19
      %p680 = scmp.lt.s32.totalorder %s679, 63
      %s681 = scalar_select %p680, %s679, 63
      %p682 = scmp.lt.s32.totalorder %s20, 0
      %s683 = scalar_select %p682, %s20, 0
      %s684 = sadd.s32 %s683, %s681
      %s685 = smul.addr %s684, 4
      %s686 = scalar_lea.vmem %s4, %s685
      // Predicated region
      $region37: #{stem_forward.1} parent=35 // pred_check
        %p687 = pneg %p151
      $region38: #{stem_forward.1} parent=35 // pred_check_branch
        %689 = sbr.rel (%p687) target = $region40
      $region39: #{stem_forward.1} parent=35 // pred_region
        %s690 = smul.u32 16, %s19
      $region40: #{stem_forward.1} parent=35 // pred_fallthru
        _
    $region36: #{stem_forward.1} parent=5 // pred_fallthru
      _
    %p691 = scmp.le.s32.totalorder 2, %s10
    // Predicated region
    $region41: #{stem_forward.1} parent=5 // pred_check
      %p692 = pneg %p691
    $region42: #{stem_forward.1} parent=5 // pred_check_branch
      %694 = sbr.rel (%p692) target = $region44
    $region43: #{stem_forward.1} parent=5 // pred_region
      %s695 = ssub.s32 %s10, 2
      // Predicated region
      $region45: #{stem_forward.1} parent=43 // pred_check
        %p696 = pneg %p157
      $region46: #{stem_forward.1} parent=43 // pred_check_branch
        %698 = sbr.rel (%p696) target = $region48
      $region47: #{stem_forward.1} parent=43 // pred_region
        %s699 = smul.u32 16, %s21
        %p700 = scmp.lt.s32.totalorder %s699, 63
        %s701 = scalar_select %p700, %s699, 63
        %p702 = scmp.lt.s32.totalorder %s22, 0
        %s703 = scalar_select %p702, %s22, 0
        %s704 = sadd.s32 %s703, %s701
        %s705 = smul.addr %s704, 4
        %s706 = scalar_lea.vmem %s4, %s705
      $region48: #{stem_forward.1} parent=43 // pred_fallthru
        _
    $region44: #{stem_forward.1} parent=5 // pred_fallthru
      _
  $region6: #{stem_forward.1} parent=0 // loop_footer
    %s14 = sadd.s32 1, %s10
  $region7: #{stem_forward.1} parent=0 // loop_footer_branch
    %9 = sbr.rel target = $region3
  $region8: #{stem_forward.1} parent=0 // loop_exit
    _

</llo_original>
